<compile_context>
chip_gen: v7x
topology: tpu7x:2x2x1
jax: 0.10.0
libtpu: 0.0.40
codegen_flags: <defaults>
</compile_context>

<pallas_src>
import jax
import jax.numpy as jnp
import numpy as np
from jax.experimental import pallas as pl
from jax.experimental.pallas import tpu as pltpu


def _rsqrt_kernel(x_ref, o_ref):
    # out = 1 / sqrt(x)  ==  C1 / sqrt(x) with C1 == ones (folded constant).
    # Single EUP op; no VPU multiply, no second input.
    o_ref[...] = jax.lax.rsqrt(x_ref[...])


def net_sqrtdiv_forward(x: jax.Array, c1_shape=(1, 2, 3, 3)) -> jax.Array:
    """Computes ones(c1_shape) / sqrt(x) with NumPy-style broadcasting.

    The all-ones constant is folded at trace time, so the kernel only sees x.
    """
    # Broadcasting glue stays in plain JAX; hot path is the Pallas kernel.
    out_shape = jnp.broadcast_shapes(c1_shape, x.shape)
    x_b = jnp.broadcast_to(x, out_shape).astype(jnp.float32)

    # Lane-dense layout: flatten everything onto the lane axis -> (1, total).
    total = int(np.prod(out_shape))
    x_2d = x_b.reshape(1, total)

    out_2d = pl.pallas_call(
        _rsqrt_kernel,
        out_shape=jax.ShapeDtypeStruct((1, total), jnp.float32),
        # No grid: single invocation over the full (tiny) array, resident in
        # VMEM.  Full-extent blocks, so no (8,128) tiling constraint applies.
        in_specs=[pl.BlockSpec(memory_space=pltpu.MemorySpace.VMEM)],
        out_specs=pl.BlockSpec(memory_space=pltpu.MemorySpace.VMEM),
    )(x_2d)

    return out_2d.reshape(out_shape)


if __name__ == "__main__":
    # Module constant: C1 = ones((1, 2, 3, 3), float32) -- used only for the
    # reference check; the kernel folds it.
    C1 = jnp.ones((1, 2, 3, 3), dtype=jnp.float32)

    # Deterministic, strictly-positive input (sqrt domain), NCHW (1, 2, 3, 3).
    key = jax.random.PRNGKey(0)
    x = jax.random.uniform(
        key, (1, 2, 3, 3), dtype=jnp.float32, minval=0.1, maxval=4.0
    )

    out = net_sqrtdiv_forward(x, c1_shape=C1.shape)
    out = jax.block_until_ready(out)

    # Reference check against plain JAX (torch semantics: C1 / sqrt(x)).
    ref = C1 / jnp.sqrt(x)
    np.testing.assert_allclose(np.asarray(out), np.asarray(ref), rtol=1e-6, atol=1e-6)

    print("KERNEL_OK")
</pallas_src>

<mosaic_0001>
module attributes {stable_mosaic.version = 11 : i64} {
  func.func @_rsqrt_kernel(%arg0: memref<1x18xf32, #tpu.memory_space<vmem>>, %arg1: memref<1x18xf32, #tpu.memory_space<vmem>>) attributes {dimension_semantics = [], scalar_prefetch = 0 : i64, scratch_operands = 0 : i64, tpu.core_type = #tpu.core_type<tc>} {
    %c0 = arith.constant 0 : index
    %c0_0 = arith.constant 0 : index
    %0 = vector.load %arg0[%c0, %c0_0] : memref<1x18xf32, #tpu.memory_space<vmem>>, vector<1x18xf32>
    %1 = math.rsqrt %0 : vector<1x18xf32>
    %c0_1 = arith.constant 0 : index
    %c0_2 = arith.constant 0 : index
    %2 = vector.load %arg1[%c0_1, %c0_2] : memref<1x18xf32, #tpu.memory_space<vmem>>, vector<1x18xf32>
    tpu.vector_store %arg1[%c0_1, %c0_2], %1 {strides = array<i32>} : memref<1x18xf32, #tpu.memory_space<vmem>>, vector<1x18xf32>,
    return
  }
}

</mosaic_0001>

<llo_original>
// kernel: tpu_custom_call.1
$region0: #{tpu_custom_call.1}
  #allocation0 [shape = 'u32[]', space=smem, size = 0x4, offset = 0x4, fixed_abs, tag = 'smem constant byte address 0x4 - core index']
  #allocation1 [shape = 'u32[144,128]{1,0:T(1,128)}', space=vmem, size = 0x12000, scoped, tag = 'internal scratch']
  %s0 = inlined_call_operand.hbm [shape: f32[1,18], index: 0, kind: input, shape index: {}]
  %s1 = inlined_call_operand.hbm [shape: f32[1,18], index: 1, kind: output, shape index: {}]
  %s2 = sld [smem:[#allocation0]]
  $region18: #{tpu_custom_call.1} parent=0
    _
  %s4 = ssub.s32 1, %s2
  %s5 = scalar_select 0, %s4, %s2
  $region1: #{tpu_custom_call.1} parent=0
    #allocation2 [shape = 'u8[512]{0}', space=vmem, size = 0x400, scoped, tag = 'input window, operand 0, single buffered']
    #allocation3 [shape = 's32[1]{0}', space=sflag, size = 0x4, scoped, tag = 'scoped memory for tpu_custom_call.1']
    #allocation4 [shape = 's32[1]{0}', space=sflag, size = 0x4, scoped, tag = 'scoped memory for tpu_custom_call.1']
    #allocation5 [shape = 'u8[512]{0}', space=vmem, size = 0x400, scoped, tag = 'output window, operand 0, single buffered']
    %6 = vsyncpa [#allocation3], 0
    %7 = vsyncpa [#allocation4], 0
    // Predicated region
    $region2: #{tpu_custom_call.1} parent=1 // pred_check
      _
    $region3: #{tpu_custom_call.1} parent=1 // pred_check_branch
      %9 = sbr.rel (0) target = $region5
    $region4: #{tpu_custom_call.1} parent=1 // pred_region
      %s11 = ssub.s32 16, 16
      %12 = vsyncadd [#allocation3], %s11
      %s14 = sshll.u32 [#allocation2], 4
      %s15 = int_to_ptr.vmem [resolvable:$true] %s14
      %17 = dma.hbm_to_vmem [thread:$0]  %s0, 16, %s15, [#allocation3]
    $region5: #{tpu_custom_call.1} parent=1 // pred_fallthru
      _
    // Predicated region
    $region6: #{tpu_custom_call.1} parent=1 // pred_check
      _
    $region7: #{tpu_custom_call.1} parent=1 // pred_check_branch
      %19 = sbr.rel (0) target = $region9
    $region8: #{tpu_custom_call.1} parent=1 // pred_region
      %20 = dma.done [#allocation3], 16
    $region9: #{tpu_custom_call.1} parent=1 // pred_fallthru
      _
    %v21 = vld [vmem:[#allocation2] sm:$0x1]
    %v22 = vrsqrt.pop %v21
    %vm23 = vcmask 139264
    %24 = vst.msk [vmem:[#allocation5] sm:$0x1] %vm23, %v22
    // Predicated region
    $region10: #{tpu_custom_call.1} parent=1 // pred_check
      _
    $region11: #{tpu_custom_call.1} parent=1 // pred_check_branch
      %26 = sbr.rel (0) target = $region13
    $region12: #{tpu_custom_call.1} parent=1 // pred_region
      %s28 = ssub.s32 16, 16
      %29 = vsyncadd [#allocation4], %s28
      %s31 = sshll.u32 [#allocation5], 4
      %s32 = int_to_ptr.vmem [resolvable:$true] %s31
      %34 = dma.vmem_to_hbm [thread:$0]  %s32, 16, %s1, [#allocation4]
    $region13: #{tpu_custom_call.1} parent=1 // pred_fallthru
      _
    // Predicated region
    $region14: #{tpu_custom_call.1} parent=1 // pred_check
      _
    $region15: #{tpu_custom_call.1} parent=1 // pred_check_branch
      %36 = sbr.rel (0) target = $region17
    $region16: #{tpu_custom_call.1} parent=1 // pred_region
      %37 = dma.done [#allocation4], 16
    $region17: #{tpu_custom_call.1} parent=1 // pred_fallthru
      _
    %38 = vsyncpa [#allocation3], 1
    %39 = vsyncpa [#allocation4], 1

</llo_original>
